<compile_context>
chip_gen: v6e
topology: v6e:2x2x1
jax: 0.10.0
libtpu: 0.0.40
codegen_flags: <defaults>
</compile_context>

<pallas_src>
import jax
import jax.numpy as jnp
from jax.experimental import pallas as pl
from jax.experimental.pallas import tpu as pltpu


def _round_up(n, m):
    return ((n + m - 1) // m) * m


def _jump_relu_kernel(x_ref, th_ref, o_ref):
    x = x_ref[...]            # (tr, tc)
    th = th_ref[...]          # (tr, tc) or (1, tc) -> broadcasts over sublanes
    o_ref[...] = jnp.where(x > th, x, jnp.zeros_like(x))


def jump_relu(x, theta, *, tr=512, tc=1024):
    """JumpReLU: where(x > theta, x, 0).

    theta must have either the same shape as x or the shape of x's last dim.
    """
    orig_shape = x.shape
    D = orig_shape[-1]
    x2 = x.reshape(-1, D)
    R = x2.shape[0]

    per_elem = (tuple(theta.shape) == tuple(orig_shape))
    if per_elem:
        th2 = theta.reshape(-1, D).astype(x.dtype)
    else:
        assert tuple(theta.shape) == (D,), "theta must match x or x's last dim"
        th2 = theta.reshape(1, D).astype(x.dtype)

    # Lane-dense, VMEM-friendly tiles (multiples of (8, 128)), clamped to the
    # (padded) problem size.
    tc = min(tc, _round_up(D, 128))
    tr = min(tr, _round_up(R, 8))
    Rp = _round_up(R, tr)
    Dp = _round_up(D, tc)

    if (Rp, Dp) != (R, D):
        # Zero padding: padded x == 0 is never > padded theta == 0, so the
        # padded region stays zero and is sliced off afterwards.
        x2 = jnp.pad(x2, ((0, Rp - R), (0, Dp - D)))
        th2 = jnp.pad(th2, ((0, (Rp - R) if per_elem else 0), (0, Dp - D)))

    if per_elem:
        th_spec = pl.BlockSpec((tr, tc), lambda i, j: (i, j))
    else:
        th_spec = pl.BlockSpec((1, tc), lambda i, j: (0, j))

    grid = (Rp // tr, Dp // tc)

    itemsize = jnp.dtype(x.dtype).itemsize
    cost = pl.CostEstimate(
        flops=2 * Rp * Dp,                                   # compare + select
        transcendentals=0,
        bytes_accessed=int((2 * Rp * Dp + th2.size) * itemsize),
    )

    out = pl.pallas_call(
        _jump_relu_kernel,
        out_shape=jax.ShapeDtypeStruct((Rp, Dp), x.dtype),
        grid_spec=pltpu.PrefetchScalarGridSpec(
            num_scalar_prefetch=0,
            grid=grid,
            in_specs=[
                pl.BlockSpec((tr, tc), lambda i, j: (i, j)),   # x tile
                th_spec,                                       # theta
            ],
            out_specs=pl.BlockSpec((tr, tc), lambda i, j: (i, j)),
        ),
        compiler_params=pltpu.CompilerParams(
            dimension_semantics=("parallel", "parallel"),
        ),
        cost_estimate=cost,
    )(x2, th2)

    return out[:R, :D].reshape(orig_shape)


if __name__ == "__main__":
    key = jax.random.PRNGKey(0)
    kx, kt, kt2 = jax.random.split(key, 3)

    # Small activation-like shape: (batch, seq, hidden); hidden is a multiple
    # of 128 so output stores are lane-dense.
    B, S, D = 4, 64, 256
    x = jax.random.normal(kx, (B, S, D), dtype=jnp.float32)

    # Case 1: theta matches the last dimension of x.
    theta = 0.1 * jax.random.normal(kt, (D,), dtype=jnp.float32)
    y = jump_relu(x, theta)
    jax.block_until_ready(y)
    ref = jnp.where(x > theta, x, jnp.zeros_like(x))
    assert jnp.array_equal(y, ref)

    # Case 2: theta has the same shape as x.
    theta_full = 0.1 * jax.random.normal(kt2, (B, S, D), dtype=jnp.float32)
    y2 = jump_relu(x, theta_full)
    jax.block_until_ready(y2)
    ref2 = jnp.where(x > theta_full, x, jnp.zeros_like(x))
    assert jnp.array_equal(y2, ref2)

    print("KERNEL_OK")
</pallas_src>

<mosaic_0001>
module attributes {stable_mosaic.version = 11 : i64} {
  func.func @_jump_relu_kernel(%arg0: i32, %arg1: i32, %arg2: memref<256x256xf32, #tpu.memory_space<vmem>>, %arg3: memref<1x256xf32, #tpu.memory_space<vmem>>, %arg4: memref<256x256xf32, #tpu.memory_space<vmem>>) attributes {dimension_semantics = [#tpu.dimension_semantics<parallel>, #tpu.dimension_semantics<parallel>], iteration_bounds = array<i64: 1, 1>, scalar_prefetch = 0 : i64, scratch_operands = 0 : i64, tpu.core_type = #tpu.core_type<tc>, window_params = [{transform_indices = @transform_0, window_bounds = array<i64: 256, 256>}, {transform_indices = @transform_1, window_bounds = array<i64: 1, 256>}, {transform_indices = @transform_2, window_bounds = array<i64: 256, 256>}]} {
    %c0 = arith.constant 0 : index
    %c0_0 = arith.constant 0 : index
    %0 = vector.load %arg2[%c0, %c0_0] : memref<256x256xf32, #tpu.memory_space<vmem>>, vector<256x256xf32>
    %c0_1 = arith.constant 0 : index
    %c0_2 = arith.constant 0 : index
    %1 = vector.load %arg3[%c0_1, %c0_2] : memref<1x256xf32, #tpu.memory_space<vmem>>, vector<1x256xf32>
    %2 = vector.broadcast %1 : vector<1x256xf32> to vector<256x256xf32>
    %3 = arith.cmpf ogt, %0, %2 : vector<256x256xf32>
    %cst = arith.constant 0.000000e+00 : f32
    %4 = vector.broadcast %cst : f32 to vector<256x256xf32>
    %5 = arith.select %3, %0, %4 : vector<256x256xi1>, vector<256x256xf32>
    %c0_3 = arith.constant 0 : index
    %c0_4 = arith.constant 0 : index
    %6 = vector.load %arg4[%c0_3, %c0_4] : memref<256x256xf32, #tpu.memory_space<vmem>>, vector<256x256xf32>
    tpu.vector_store %arg4[%c0_3, %c0_4], %5 {strides = array<i32>} : memref<256x256xf32, #tpu.memory_space<vmem>>, vector<256x256xf32>,
    return
  }
  func.func @transform_0(%arg0: i32, %arg1: i32) -> (i32, i32) {
    %c0_i32 = arith.constant 0 : i32
    return %arg0, %arg1 : i32, i32
  }
  func.func @transform_1(%arg0: i32, %arg1: i32) -> (i32, i32) {
    %c0_i32 = arith.constant 0 : i32
    %c0_i32_0 = arith.constant 0 : i32
    return %c0_i32, %arg1 : i32, i32
  }
  func.func @transform_2(%arg0: i32, %arg1: i32) -> (i32, i32) {
    %c0_i32 = arith.constant 0 : i32
    return %arg0, %arg1 : i32, i32
  }
}

</mosaic_0001>

<llo_original>
// kernel: tpu_custom_call.1
$region0: #{tpu_custom_call.1}
  #allocation0 [shape = 'u32[]', space=smem, size = 0x4, offset = 0x4, fixed_abs, tag = 'smem constant byte address 0x4 - core index']
  #allocation1 [shape = 'u32[144,128]{1,0:T(1,128)}', space=vmem, size = 0x12000, scoped, tag = 'internal scratch']
  %s0 = inlined_call_operand.hbm [shape: f32[256,256], index: 0, kind: input, shape index: {}]
  %s1 = inlined_call_operand.hbm [shape: f32[1,256], index: 1, kind: input, shape index: {}]
  %s2 = inlined_call_operand.hbm [shape: f32[256,256], index: 2, kind: output, shape index: {}]
  %s3 = sld [smem:[#allocation0]]
  $region26: #{tpu_custom_call.1} parent=0
    _
  %s5 = ssub.s32 1, %s3
  %s6 = scalar_select 0, %s5, %s3
  $region1: #{tpu_custom_call.1} parent=0
    #allocation2 [shape = 'u8[262144]{0}', space=vmem, size = 0x40000, scoped, tag = 'input window, operand 0, single buffered']
    #allocation3 [shape = 's32[1]{0}', space=sflag, size = 0x4, scoped, tag = 'scoped memory for tpu_custom_call.1']
    #allocation4 [shape = 's32[1]{0}', space=sflag, size = 0x4, scoped, tag = 'scoped memory for tpu_custom_call.1']
    #allocation5 [shape = 'u8[1024]{0}', space=vmem, size = 0x400, scoped, tag = 'input window, operand 1, single buffered']
    #allocation6 [shape = 's32[1]{0}', space=sflag, size = 0x4, scoped, tag = 'scoped memory for tpu_custom_call.1']
    #allocation7 [shape = 'u8[262144]{0}', space=vmem, size = 0x40000, scoped, tag = 'output window, operand 0, single buffered']
    %7 = vsyncpa [#allocation3], 0
    %8 = vsyncpa [#allocation6], 0
    %9 = vsyncpa [#allocation4], 0
    // Predicated region
    $region2: #{tpu_custom_call.1} parent=1 // pred_check
      _
    $region3: #{tpu_custom_call.1} parent=1 // pred_check_branch
      %11 = sbr.rel (0) target = $region5
    $region4: #{tpu_custom_call.1} parent=1 // pred_region
      %s13 = ssub.s32 8192, 8192
      %14 = vsyncadd [#allocation3], %s13
      %s15 = sshll.u32 [#allocation2], 4
      %s16 = int_to_ptr.vmem [resolvable:$true] %s15
      %21 = dma.hbm_to_vmem [thread:$0]  %s0, 8192, %s16, [#allocation3], 256, 256, 16
    $region5: #{tpu_custom_call.1} parent=1 // pred_fallthru
      _
    // Predicated region
    $region6: #{tpu_custom_call.1} parent=1 // pred_check
      _
    $region7: #{tpu_custom_call.1} parent=1 // pred_check_branch
      %23 = sbr.rel (0) target = $region9
    $region8: #{tpu_custom_call.1} parent=1 // pred_region
      %s25 = ssub.s32 32, 32
      %26 = vsyncadd [#allocation6], %s25
      %s28 = sshll.u32 [#allocation5], 4
      %s29 = int_to_ptr.vmem [resolvable:$true] %s28
      %31 = dma.hbm_to_vmem [thread:$0]  %s1, 32, %s29, [#allocation6]
    $region9: #{tpu_custom_call.1} parent=1 // pred_fallthru
      _
    // Predicated region
    $region10: #{tpu_custom_call.1} parent=1 // pred_check
      _
    $region11: #{tpu_custom_call.1} parent=1 // pred_check_branch
      %33 = sbr.rel (0) target = $region13
    $region12: #{tpu_custom_call.1} parent=1 // pred_region
      %34 = dma.done [#allocation3], 8192
    $region13: #{tpu_custom_call.1} parent=1 // pred_fallthru
      _
    // Predicated region
    $region14: #{tpu_custom_call.1} parent=1 // pred_check
      _
    $region15: #{tpu_custom_call.1} parent=1 // pred_check_branch
      %36 = sbr.rel (0) target = $region17
    $region16: #{tpu_custom_call.1} parent=1 // pred_region
      %37 = dma.done [#allocation6], 32
    $region17: #{tpu_custom_call.1} parent=1 // pred_fallthru
      _
    %v38 = vld [vmem:[#allocation2] sm:$0xff]
    %v39 = vld [vmem:[#allocation2 + $0x8] sm:$0xff]
    %v40 = vld [vmem:[#allocation2 + $0x10] sm:$0xff]
    %v41 = vld [vmem:[#allocation2 + $0x18] sm:$0xff]
    %v42 = vld [vmem:[#allocation2 + $0x20] sm:$0xff]
    %v43 = vld [vmem:[#allocation2 + $0x28] sm:$0xff]
    %v44 = vld [vmem:[#allocation2 + $0x30] sm:$0xff]
    %v45 = vld [vmem:[#allocation2 + $0x38] sm:$0xff]
    %v46 = vld [vmem:[#allocation2 + $0x40] sm:$0xff]
    %v47 = vld [vmem:[#allocation2 + $0x48] sm:$0xff]
    %v48 = vld [vmem:[#allocation2 + $0x50] sm:$0xff]
    %v49 = vld [vmem:[#allocation2 + $0x58] sm:$0xff]
    %v50 = vld [vmem:[#allocation2 + $0x60] sm:$0xff]
    %v51 = vld [vmem:[#allocation2 + $0x68] sm:$0xff]
    %v52 = vld [vmem:[#allocation2 + $0x70] sm:$0xff]
    %v53 = vld [vmem:[#allocation2 + $0x78] sm:$0xff]
    %v54 = vld [vmem:[#allocation2 + $0x80] sm:$0xff]
    %v55 = vld [vmem:[#allocation2 + $0x88] sm:$0xff]
    %v56 = vld [vmem:[#allocation2 + $0x90] sm:$0xff]
    %v57 = vld [vmem:[#allocation2 + $0x98] sm:$0xff]
    %v58 = vld [vmem:[#allocation2 + $0xa0] sm:$0xff]
    %v59 = vld [vmem:[#allocation2 + $0xa8] sm:$0xff]
    %v60 = vld [vmem:[#allocation2 + $0xb0] sm:$0xff]
    %v61 = vld [vmem:[#allocation2 + $0xb8] sm:$0xff]
    %v62 = vld [vmem:[#allocation2 + $0xc0] sm:$0xff]
    %v63 = vld [vmem:[#allocation2 + $0xc8] sm:$0xff]
    %v64 = vld [vmem:[#allocation2 + $0xd0] sm:$0xff]
    %v65 = vld [vmem:[#allocation2 + $0xd8] sm:$0xff]
    %v66 = vld [vmem:[#allocation2 + $0xe0] sm:$0xff]
    %v67 = vld [vmem:[#allocation2 + $0xe8] sm:$0xff]
    %v68 = vld [vmem:[#allocation2 + $0xf0] sm:$0xff]
    %v69 = vld [vmem:[#allocation2 + $0xf8] sm:$0xff]
    %v70 = vld [vmem:[#allocation2 + $0x100] sm:$0xff]
    %v71 = vld [vmem:[#allocation2 + $0x108] sm:$0xff]
    %v72 = vld [vmem:[#allocation2 + $0x110] sm:$0xff]
    %v73 = vld [vmem:[#allocation2 + $0x118] sm:$0xff]
    %v74 = vld [vmem:[#allocation2 + $0x120] sm:$0xff]
    %v75 = vld [vmem:[#allocation2 + $0x128] sm:$0xff]
    %v76 = vld [vmem:[#allocation2 + $0x130] sm:$0xff]
    %v77 = vld [vmem:[#allocation2 + $0x138] sm:$0xff]
    %v78 = vld [vmem:[#allocation2 + $0x140] sm:$0xff]
    %v79 = vld [vmem:[#allocation2 + $0x148] sm:$0xff]
    %v80 = vld [vmem:[#allocation2 + $0x150] sm:$0xff]
    %v81 = vld [vmem:[#allocation2 + $0x158] sm:$0xff]
    %v82 = vld [vmem:[#allocation2 + $0x160] sm:$0xff]
    %v83 = vld [vmem:[#allocation2 + $0x168] sm:$0xff]
    %v84 = vld [vmem:[#allocation2 + $0x170] sm:$0xff]
    %v85 = vld [vmem:[#allocation2 + $0x178] sm:$0xff]
    %v86 = vld [vmem:[#allocation2 + $0x180] sm:$0xff]
    %v87 = vld [vmem:[#allocation2 + $0x188] sm:$0xff]
    %v88 = vld [vmem:[#allocation2 + $0x190] sm:$0xff]
    %v89 = vld [vmem:[#allocation2 + $0x198] sm:$0xff]
    %v90 = vld [vmem:[#allocation2 + $0x1a0] sm:$0xff]
    %v91 = vld [vmem:[#allocation2 + $0x1a8] sm:$0xff]
    %v92 = vld [vmem:[#allocation2 + $0x1b0] sm:$0xff]
    %v93 = vld [vmem:[#allocation2 + $0x1b8] sm:$0xff]
    %v94 = vld [vmem:[#allocation2 + $0x1c0] sm:$0xff]
    %v95 = vld [vmem:[#allocation2 + $0x1c8] sm:$0xff]
    %v96 = vld [vmem:[#allocation2 + $0x1d0] sm:$0xff]
    %v97 = vld [vmem:[#allocation2 + $0x1d8] sm:$0xff]
    %v98 = vld [vmem:[#allocation2 + $0x1e0] sm:$0xff]
    %v99 = vld [vmem:[#allocation2 + $0x1e8] sm:$0xff]
    %v100 = vld [vmem:[#allocation2 + $0x1f0] sm:$0xff]
    %v101 = vld [vmem:[#allocation2 + $0x1f8] sm:$0xff]
    %v102 = vld [vmem:[#allocation5] sm:$0x3]
    %v104 = vlaneseq
    %v105 = vshrl.u32 %v104, 7
    %v106 = vsub.s32 0, %v105
    %v107 = vrot.slane %v102, %v106
    %v108 = vlaneseq
    %v109 = vshrl.u32 %v108, 7
    %v110 = vsub.s32 1, %v109
    %v111 = vrot.slane %v102, %v110
    %vm114 = vcmp.gt.f32.partialorder %v38, %v107
    %vm115 = vcmp.gt.f32.partialorder %v39, %v111
    %vm116 = vcmp.gt.f32.partialorder %v40, %v107
    %vm117 = vcmp.gt.f32.partialorder %v41, %v111
    %vm118 = vcmp.gt.f32.partialorder %v42, %v107
    %vm119 = vcmp.gt.f32.partialorder %v43, %v111
    %vm120 = vcmp.gt.f32.partialorder %v44, %v107
    %vm121 = vcmp.gt.f32.partialorder %v45, %v111
    %vm122 = vcmp.gt.f32.partialorder %v46, %v107
    %vm123 = vcmp.gt.f32.partialorder %v47, %v111
    %vm124 = vcmp.gt.f32.partialorder %v48, %v107
    %vm125 = vcmp.gt.f32.partialorder %v49, %v111
    %vm126 = vcmp.gt.f32.partialorder %v50, %v107
    %vm127 = vcmp.gt.f32.partialorder %v51, %v111
    %vm128 = vcmp.gt.f32.partialorder %v52, %v107
    %vm129 = vcmp.gt.f32.partialorder %v53, %v111
    %vm130 = vcmp.gt.f32.partialorder %v54, %v107
    %vm131 = vcmp.gt.f32.partialorder %v55, %v111
    %vm132 = vcmp.gt.f32.partialorder %v56, %v107
    %vm133 = vcmp.gt.f32.partialorder %v57, %v111
    %vm134 = vcmp.gt.f32.partialorder %v58, %v107
    %vm135 = vcmp.gt.f32.partialorder %v59, %v111
    %vm136 = vcmp.gt.f32.partialorder %v60, %v107
    %vm137 = vcmp.gt.f32.partialorder %v61, %v111
    %vm138 = vcmp.gt.f32.partialorder %v62, %v107
    %vm139 = vcmp.gt.f32.partialorder %v63, %v111
    %vm140 = vcmp.gt.f32.partialorder %v64, %v107
    %vm141 = vcmp.gt.f32.partialorder %v65, %v111
    %vm142 = vcmp.gt.f32.partialorder %v66, %v107
    %vm143 = vcmp.gt.f32.partialorder %v67, %v111
    %vm144 = vcmp.gt.f32.partialorder %v68, %v107
    %vm145 = vcmp.gt.f32.partialorder %v69, %v111
    %vm146 = vcmp.gt.f32.partialorder %v70, %v107
    %vm147 = vcmp.gt.f32.partialorder %v71, %v111
    %vm148 = vcmp.gt.f32.partialorder %v72, %v107
    %vm149 = vcmp.gt.f32.partialorder %v73, %v111
    %vm150 = vcmp.gt.f32.partialorder %v74, %v107
    %vm151 = vcmp.gt.f32.partialorder %v75, %v111
    %vm152 = vcmp.gt.f32.partialorder %v76, %v107
    %vm153 = vcmp.gt.f32.partialorder %v77, %v111
    %vm154 = vcmp.gt.f32.partialorder %v78, %v107
    %vm155 = vcmp.gt.f32.partialorder %v79, %v111
    %vm156 = vcmp.gt.f32.partialorder %v80, %v107
    %vm157 = vcmp.gt.f32.partialorder %v81, %v111
    %vm158 = vcmp.gt.f32.partialorder %v82, %v107
    %vm159 = vcmp.gt.f32.partialorder %v83, %v111
    %vm160 = vcmp.gt.f32.partialorder %v84, %v107
    %vm161 = vcmp.gt.f32.partialorder %v85, %v111
    %vm162 = vcmp.gt.f32.partialorder %v86, %v107
    %vm163 = vcmp.gt.f32.partialorder %v87, %v111
    %vm164 = vcmp.gt.f32.partialorder %v88, %v107
    %vm165 = vcmp.gt.f32.partialorder %v89, %v111
    %vm166 = vcmp.gt.f32.partialorder %v90, %v107
    %vm167 = vcmp.gt.f32.partialorder %v91, %v111
    %vm168 = vcmp.gt.f32.partialorder %v92, %v107
    %vm169 = vcmp.gt.f32.partialorder %v93, %v111
    %vm170 = vcmp.gt.f32.partialorder %v94, %v107
    %vm171 = vcmp.gt.f32.partialorder %v95, %v111
    %vm172 = vcmp.gt.f32.partialorder %v96, %v107
    %vm173 = vcmp.gt.f32.partialorder %v97, %v111
    %vm174 = vcmp.gt.f32.partialorder %v98, %v107
    %vm175 = vcmp.gt.f32.partialorder %v99, %v111
    %vm176 = vcmp.gt.f32.partialorder %v100, %v107
    %vm177 = vcmp.gt.f32.partialorder %v101, %v111
    %v178 = vsel %vm114, %v38, 0.0
    %v179 = vsel %vm115, %v39, 0.0
    %v180 = vsel %vm116, %v40, 0.0
    %v181 = vsel %vm117, %v41, 0.0
    %v182 = vsel %vm118, %v42, 0.0
    %v183 = vsel %vm119, %v43, 0.0
    %v184 = vsel %vm120, %v44, 0.0
    %v185 = vsel %vm121, %v45, 0.0
    %v186 = vsel %vm122, %v46, 0.0
    %v187 = vsel %vm123, %v47, 0.0
    %v188 = vsel %vm124, %v48, 0.0
    %v189 = vsel %vm125, %v49, 0.0
    %v190 = vsel %vm126, %v50, 0.0
    %v191 = vsel %vm127, %v51, 0.0
    %v192 = vsel %vm128, %v52, 0.0
    %v193 = vsel %vm129, %v53, 0.0
    %v194 = vsel %vm130, %v54, 0.0
    %v195 = vsel %vm131, %v55, 0.0
    %v196 = vsel %vm132, %v56, 0.0
    %v197 = vsel %vm133, %v57, 0.0
    %v198 = vsel %vm134, %v58, 0.0
    %v199 = vsel %vm135, %v59, 0.0
    %v200 = vsel %vm136, %v60, 0.0
    %v201 = vsel %vm137, %v61, 0.0
    %v202 = vsel %vm138, %v62, 0.0
    %v203 = vsel %vm139, %v63, 0.0
    %v204 = vsel %vm140, %v64, 0.0
    %v205 = vsel %vm141, %v65, 0.0
    %v206 = vsel %vm142, %v66, 0.0
    %v207 = vsel %vm143, %v67, 0.0
    %v208 = vsel %vm144, %v68, 0.0
    %v209 = vsel %vm145, %v69, 0.0
    %v210 = vsel %vm146, %v70, 0.0
    %v211 = vsel %vm147, %v71, 0.0
    %v212 = vsel %vm148, %v72, 0.0
    %v213 = vsel %vm149, %v73, 0.0
    %v214 = vsel %vm150, %v74, 0.0
    %v215 = vsel %vm151, %v75, 0.0
    %v216 = vsel %vm152, %v76, 0.0
    %v217 = vsel %vm153, %v77, 0.0
    %v218 = vsel %vm154, %v78, 0.0
    %v219 = vsel %vm155, %v79, 0.0
    %v220 = vsel %vm156, %v80, 0.0
    %v221 = vsel %vm157, %v81, 0.0
    %v222 = vsel %vm158, %v82, 0.0
    %v223 = vsel %vm159, %v83, 0.0
    %v224 = vsel %vm160, %v84, 0.0
    %v225 = vsel %vm161, %v85, 0.0
    %v226 = vsel %vm162, %v86, 0.0
    %v227 = vsel %vm163, %v87, 0.0
    %v228 = vsel %vm164, %v88, 0.0
    %v229 = vsel %vm165, %v89, 0.0
    %v230 = vsel %vm166, %v90, 0.0
    %v231 = vsel %vm167, %v91, 0.0
    %v232 = vsel %vm168, %v92, 0.0
    %v233 = vsel %vm169, %v93, 0.0
    %v234 = vsel %vm170, %v94, 0.0
    %v235 = vsel %vm171, %v95, 0.0
    %v236 = vsel %vm172, %v96, 0.0
    %v237 = vsel %vm173, %v97, 0.0
    %v238 = vsel %vm174, %v98, 0.0
    %v239 = vsel %vm175, %v99, 0.0
    %v240 = vsel %vm176, %v100, 0.0
    %v241 = vsel %vm177, %v101, 0.0
    %242 = vst [vmem:[#allocation7] sm:$0xff] %v178
    %243 = vst [vmem:[#allocation7 + $0x8] sm:$0xff] %v179
    %244 = vst [vmem:[#allocation7 + $0x10] sm:$0xff] %v180
    %245 = vst [vmem:[#allocation7 + $0x18] sm:$0xff] %v181
    %246 = vst [vmem:[#allocation7 + $0x20] sm:$0xff] %v182
    %247 = vst [vmem:[#allocation7 + $0x28] sm:$0xff] %v183
    %248 = vst [vmem:[#allocation7 + $0x30] sm:$0xff] %v184
    %249 = vst [vmem:[#allocation7 + $0x38] sm:$0xff] %v185
    %250 = vst [vmem:[#allocation7 + $0x40] sm:$0xff] %v186
    %251 = vst [vmem:[#allocation7 + $0x48] sm:$0xff] %v187
    %252 = vst [vmem:[#allocation7 + $0x50] sm:$0xff] %v188
    %253 = vst [vmem:[#allocation7 + $0x58] sm:$0xff] %v189
    %254 = vst [vmem:[#allocation7 + $0x60] sm:$0xff] %v190
    %255 = vst [vmem:[#allocation7 + $0x68] sm:$0xff] %v191
    %256 = vst [vmem:[#allocation7 + $0x70] sm:$0xff] %v192
    %257 = vst [vmem:[#allocation7 + $0x78] sm:$0xff] %v193
    %258 = vst [vmem:[#allocation7 + $0x80] sm:$0xff] %v194
    %259 = vst [vmem:[#allocation7 + $0x88] sm:$0xff] %v195
    %260 = vst [vmem:[#allocation7 + $0x90] sm:$0xff] %v196
    %261 = vst [vmem:[#allocation7 + $0x98] sm:$0xff] %v197
    %262 = vst [vmem:[#allocation7 + $0xa0] sm:$0xff] %v198
    %263 = vst [vmem:[#allocation7 + $0xa8] sm:$0xff] %v199
    %264 = vst [vmem:[#allocation7 + $0xb0] sm:$0xff] %v200
    %265 = vst [vmem:[#allocation7 + $0xb8] sm:$0xff] %v201
    %266 = vst [vmem:[#allocation7 + $0xc0] sm:$0xff] %v202
    %267 = vst [vmem:[#allocation7 + $0xc8] sm:$0xff] %v203
    %268 = vst [vmem:[#allocation7 + $0xd0] sm:$0xff] %v204
    %269 = vst [vmem:[#allocation7 + $0xd8] sm:$0xff] %v205
    %270 = vst [vmem:[#allocation7 + $0xe0] sm:$0xff] %v206
    %271 = vst [vmem:[#allocation7 + $0xe8] sm:$0xff] %v207
    %272 = vst [vmem:[#allocation7 + $0xf0] sm:$0xff] %v208
    %273 = vst [vmem:[#allocation7 + $0xf8] sm:$0xff] %v209
    %274 = vst [vmem:[#allocation7 + $0x100] sm:$0xff] %v210
    %275 = vst [vmem:[#allocation7 + $0x108] sm:$0xff] %v211
    %276 = vst [vmem:[#allocation7 + $0x110] sm:$0xff] %v212
    %277 = vst [vmem:[#allocation7 + $0x118] sm:$0xff] %v213
    %278 = vst [vmem:[#allocation7 + $0x120] sm:$0xff] %v214
    %279 = vst [vmem:[#allocation7 + $0x128] sm:$0xff] %v215
    %280 = vst [vmem:[#allocation7 + $0x130] sm:$0xff] %v216
    %281 = vst [vmem:[#allocation7 + $0x138] sm:$0xff] %v217
    %282 = vst [vmem:[#allocation7 + $0x140] sm:$0xff] %v218
    %283 = vst [vmem:[#allocation7 + $0x148] sm:$0xff] %v219
    %284 = vst [vmem:[#allocation7 + $0x150] sm:$0xff] %v220
    %285 = vst [vmem:[#allocation7 + $0x158] sm:$0xff] %v221
    %286 = vst [vmem:[#allocation7 + $0x160] sm:$0xff] %v222
    %287 = vst [vmem:[#allocation7 + $0x168] sm:$0xff] %v223
    %288 = vst [vmem:[#allocation7 + $0x170] sm:$0xff] %v224
    %289 = vst [vmem:[#allocation7 + $0x178] sm:$0xff] %v225
    %290 = vst [vmem:[#allocation7 + $0x180] sm:$0xff] %v226
    %291 = vst [vmem:[#allocation7 + $0x188] sm:$0xff] %v227
    %292 = vst [vmem:[#allocation7 + $0x190] sm:$0xff] %v228
    %293 = vst [vmem:[#allocation7 + $0x198] sm:$0xff] %v229
    %294 = vst [vmem:[#allocation7 + $0x1a0] sm:$0xff] %v230
    %295 = vst [vmem:[#allocation7 + $0x1a8] sm:$0xff] %v231
    %296 = vst [vmem:[#allocation7 + $0x1b0] sm:$0xff] %v232
    %297 = vst [vmem:[#allocation7 + $0x1b8] sm:$0xff] %v233
    %298 = vst [vmem:[#allocation7 + $0x1c0] sm:$0xff] %v234
    %299 = vst [vmem:[#allocation7 + $0x1c8] sm:$0xff] %v235
    %300 = vst [vmem:[#allocation7 + $0x1d0] sm:$0xff] %v236
    %301 = vst [vmem:[#allocation7 + $0x1d8] sm:$0xff] %v237
    %302 = vst [vmem:[#allocation7 + $0x1e0] sm:$0xff] %v238
    %303 = vst [vmem:[#allocation7 + $0x1e8] sm:$0xff] %v239
    %304 = vst [vmem:[#allocation7 + $0x1f0] sm:$0xff] %v240
    %305 = vst [vmem:[#allocation7 + $0x1f8] sm:$0xff] %v241
    // Predicated region
    $region18: #{tpu_custom_call.1} parent=1 // pred_check
      _
    $region19: #{tpu_custom_call.1} parent=1 // pred_check_branch
      %307 = sbr.rel (0) target = $region21
    $region20: #{tpu_custom_call.1} parent=1 // pred_region
      %s309 = ssub.s32 8192, 8192
      %310 = vsyncadd [#allocation4], %s309
      %s311 = sshll.u32 [#allocation7], 4
      %s312 = int_to_ptr.vmem [resolvable:$true] %s311
      %317 = dma.vmem_to_hbm [thread:$0]  %s312, 8192, %s2, [#allocation4], 256, 256, 16
    $region21: #{tpu_custom_call.1} parent=1 // pred_fallthru
      _
    // Predicated region
    $region22: #{tpu_custom_call.1} parent=1 // pred_check
      _
    $region23: #{tpu_custom_call.1} parent=1 // pred_check_branch
      %319 = sbr.rel (0) target = $region25
    $region24: #{tpu_custom_call.1} parent=1 // pred_region
      %320 = dma.done [#allocation4], 8192
    $region25: #{tpu_custom_call.1} parent=1 // pred_fallthru
      _
    %321 = vsyncpa [#allocation3], 1
    %322 = vsyncpa [#allocation6], 1
    %323 = vsyncpa [#allocation4], 1

</llo_original>
